<compile_context>
chip_gen: v6e
topology: v6e:2x2x1
jax: 0.10.0
libtpu: 0.0.40
codegen_flags: <defaults>
</compile_context>

<pallas_src>
import math
import functools

import jax
import jax.numpy as jnp
from jax.experimental import pallas as pl
from jax.experimental.pallas import tpu as pltpu

_LANE = 128      # lane width: hidden feature dims padded to multiples of this
_SUBLANE = 8     # sublane: batch tiles padded to multiples of this
_NEG_BIG = -1e30 # mask value for padded columns inside a (hidden) log-softmax


def _round_up(x, m):
    return (x + m - 1) // m * m


def _vmem_budget_bytes():
    """Per-generation VMEM budget: ~85% of physical per-core VMEM.

    v5e/v6e: 128 MiB physical -> ~109 MiB budget; v7x: 64 MiB -> ~54 MiB,
    leaving headroom for Mosaic internal scratch / DMA descriptors."""
    try:
        cap = int(pltpu.get_tpu_info().vmem_capacity_bytes)
    except Exception:
        cap = 64 << 20        # conservative fallback (v7x per-TC physical)
    return (cap * 85) // 100


def _resident_spec(shape):
    """Constant-index, VMEM-resident operand; single-buffered when supported."""
    index_map = lambda i: (0,) * len(shape)
    try:
        return pl.BlockSpec(shape, index_map, pipeline_mode=pl.Buffered(1))
    except (TypeError, AttributeError):      # older BlockSpec w/o pipeline_mode
        return pl.BlockSpec(shape, index_map)


def _make_mlp_kernel(num_layers, real_out_dims, padded_out_dims,
                     hidden_activation, output_activation):
    """Builds kernel(x_ref, w0, b0, ..., w_{L-1}, b_{L-1}, o_ref)."""

    def _mask_padded_cols(h, real, padded):
        # Only needed if a log-softmax is applied on a lane-padded hidden layer.
        if padded == real:
            return h
        col = jax.lax.broadcasted_iota(jnp.int32, h.shape, dimension=1)
        return jnp.where(col < real, h, _NEG_BIG)

    def _log_softmax(h, real, padded):
        h = _mask_padded_cols(h, real, padded)
        m = jnp.max(h, axis=-1, keepdims=True)
        z = h - m
        lse = jnp.log(jnp.sum(jnp.exp(z), axis=-1, keepdims=True))
        return z - lse

    def _activation(name, h, real, padded):
        # Names mirror the torch module's `settings` dict.
        if name == "relu":            # nn.ReLU
            return jnp.maximum(h, 0.0)
        if name == "logsig":          # nn.Sigmoid (module's name is misleading)
            return jax.nn.sigmoid(h)
        if name == "softmax":         # nn.LogSoftmax (module's name is misleading)
            return _log_softmax(h, real, padded)
        raise ValueError(f"unknown activation: {name}")

    def kernel(*refs):
        x_ref, o_ref = refs[0], refs[-1]
        p_refs = refs[1:-1]           # w0, b0, w1, b1, ...

        h = x_ref[...]
        for layer in range(num_layers):
            w_ref = p_refs[2 * layer]
            b_ref = p_refs[2 * layer + 1]
            # bf16 weights -> bf16 MXU operands; accumulation in f32.
            lhs = h if h.dtype == w_ref.dtype else h.astype(w_ref.dtype)
            h = jnp.dot(lhs, w_ref[...], preferred_element_type=jnp.float32)
            h = h + b_ref[...]         # biases stored f32 -> no per-layer cast
            if layer < num_layers - 1:
                h = _activation(hidden_activation, h,
                                real_out_dims[layer], padded_out_dims[layer])

        # Output activation is always applied (see module quirk above). Last
        # layer is unpadded, so no column masking is required here.
        h = _activation(output_activation, h,
                        real_out_dims[-1], padded_out_dims[-1])
        o_ref[...] = h.astype(o_ref.dtype)

    return kernel


def init_mlp_params(key, architecture, dtype=jnp.float32):
    """PyTorch-style init: U(-1/sqrt(fan_in), 1/sqrt(fan_in)); W as [fan_in, fan_out]."""
    params = []
    for i in range(len(architecture) - 1):
        fan_in, fan_out = architecture[i], architecture[i + 1]
        key, kw, kb = jax.random.split(key, 3)
        bound = 1.0 / math.sqrt(fan_in)
        w = jax.random.uniform(kw, (fan_in, fan_out), dtype, -bound, bound)
        b = jax.random.uniform(kb, (1, fan_out), dtype, -bound, bound)
        params += [w, b]
    return tuple(params)


def prepare_params(params_flat, weight_dtype=jnp.bfloat16):
    """One-time parameter preparation (do NOT call per forward).

    Pads hidden feature dims to the 128-lane width, casts weights to
    `weight_dtype` (bf16 by default -> fast MXU path, half the weight bytes),
    keeps biases in f32. The first-layer input dim and last-layer output dim
    stay unpadded so x / output never carry padded HBM bytes.

    Returns (prepared_params, dims) where `dims` are the true feature dims;
    pass `dims` as the static argument of mlp_forward."""
    num_layers = len(params_flat) // 2
    dims = [params_flat[0].shape[0]] + [params_flat[2 * l].shape[1]
                                        for l in range(num_layers)]
    prepared = []
    for l in range(num_layers):
        w = params_flat[2 * l]
        b = params_flat[2 * l + 1].reshape(1, -1)
        in_pad = 0 if l == 0 else _round_up(dims[l], _LANE) - dims[l]
        out_pad = (0 if l == num_layers - 1
                   else _round_up(dims[l + 1], _LANE) - dims[l + 1])
        w = jnp.pad(w, ((0, in_pad), (0, out_pad))).astype(weight_dtype)
        b = jnp.pad(b, ((0, 0), (0, out_pad))).astype(jnp.float32)
        prepared += [w, b]
    return tuple(prepared), tuple(dims)


@functools.partial(jax.jit, static_argnames=("dims", "hidden_activation",
                                             "output_activation", "tb"))
def mlp_forward(x, prepared_params, dims, hidden_activation="relu",
                output_activation="softmax", tb=None):
    """Fused MLP forward. `prepared_params` / `dims` come from prepare_params()."""
    num_layers = len(prepared_params) // 2
    batch, d_in = x.shape

    pdims_out = tuple(prepared_params[2 * l].shape[1] for l in range(num_layers))
    d_out = pdims_out[-1]                       # last layer kept unpadded
    out_dtype = x.dtype                         # no forced f32 writeback
    out_bytes = jnp.dtype(out_dtype).itemsize

    # ----- batch tile: >=4 grid steps when batch allows (v7x 2-TC split) ------
    if tb is None:
        tb = min(1024, _round_up(max(pl.cdiv(batch, 4), _SUBLANE), _SUBLANE))
    tb = max(_SUBLANE, _round_up(int(tb), _SUBLANE))

    budget = _vmem_budget_bytes()
    param_bytes = sum(int(p.size) * p.dtype.itemsize for p in prepared_params)
    max_feat = max((d_in,) + pdims_out)
    row_bytes = (2 * d_in * x.dtype.itemsize      # double-buffered x tile
                 + 2 * d_out * out_bytes          # double-buffered out tile
                 + 4 * max_feat * 4)              # live f32 intermediates headroom
    avail = budget - param_bytes - (4 << 20)
    if avail > 0:
        tb = min(tb, max(_SUBLANE, (avail // row_bytes) // _SUBLANE * _SUBLANE))
    # TODO(synk): if resident params alone exceed ~half the per-core budget,
    # stream the widest layer's weights over an extra 'arbitrary' grid axis
    # (pltpu.emit_pipeline) instead of shrinking tb.

    b_pad = _round_up(max(batch, tb), tb)
    x_p = x if b_pad == batch else jnp.pad(x, ((0, b_pad - batch), (0, 0)))

    # ----- specs: batch grid; single-buffered, VMEM-resident weights/biases ----
    grid = (b_pad // tb,)
    in_specs = [pl.BlockSpec((tb, d_in), lambda i: (i, 0))]
    for l in range(num_layers):
        in_specs.append(_resident_spec(prepared_params[2 * l].shape))
        in_specs.append(_resident_spec(prepared_params[2 * l + 1].shape))
    out_specs = pl.BlockSpec((tb, d_out), lambda i: (i, 0))

    vmem_needed = (2 * tb * d_in * x.dtype.itemsize
                   + 2 * tb * d_out * out_bytes
                   + param_bytes                     # single-buffered params
                   + 4 * tb * max_feat * 4
                   + (4 << 20))
    vmem_limit = int(min(max(vmem_needed, 8 << 20), budget))

    # ----- advisory cost estimate ---------------------------------------------
    flops = 2 * batch * (d_in * pdims_out[0]
                         + sum(pdims_out[i] * pdims_out[i + 1]
                               for i in range(num_layers - 1)))
    trans = batch * d_out                            # exp in the final log-softmax
    if hidden_activation == "logsig":
        trans += batch * sum(pdims_out[:-1])
    bytes_accessed = (batch * d_in * x.dtype.itemsize + param_bytes
                      + batch * d_out * out_bytes)
    cost = pl.CostEstimate(flops=int(flops), transcendentals=int(trans),
                           bytes_accessed=int(bytes_accessed))

    kernel = _make_mlp_kernel(num_layers, tuple(dims[1:]), pdims_out,
                              hidden_activation, output_activation)

    out = pl.pallas_call(
        kernel,
        out_shape=jax.ShapeDtypeStruct((b_pad, d_out), out_dtype),
        grid=grid,
        in_specs=in_specs,
        out_specs=out_specs,
        compiler_params=pltpu.CompilerParams(
            dimension_semantics=("parallel",),
            vmem_limit_bytes=vmem_limit),
        cost_estimate=cost,
    )(x_p, *prepared_params)

    # Feature dim is already exact; slice only batch padding (skipped when none).
    return out if b_pad == batch else out[:batch]


def reference_forward(x, params_flat, hidden_activation="relu",
                      output_activation="softmax"):
    def act(name, h):
        if name == "relu":
            return jnp.maximum(h, 0.0)
        if name == "logsig":
            return jax.nn.sigmoid(h)
        return jax.nn.log_softmax(h, axis=-1)

    num_layers = len(params_flat) // 2
    h = x.astype(jnp.float32)
    for l in range(num_layers):
        w = params_flat[2 * l].astype(jnp.float32)
        b = params_flat[2 * l + 1].reshape(1, -1).astype(jnp.float32)
        h = h @ w + b
        if l < num_layers - 1:
            h = act(hidden_activation, h)
    return act(output_activation, h)


if __name__ == "__main__":
    # Small shapes consistent with the MLP forward: architecture [16, 32, 32, 10],
    # batch 48 (exercises hidden-dim padding and a multi-step batch grid).
    architecture = [16, 32, 32, 10]
    batch = 48

    key = jax.random.PRNGKey(0)
    key, kx = jax.random.split(key)
    x = jax.random.normal(kx, (batch, architecture[0]), jnp.float32)
    params = init_mlp_params(key, architecture, dtype=jnp.float32)
    ref = reference_forward(x, params)

    # f32-weight path: exact parity with the pure-JAX reference.
    p32, dims = prepare_params(params, weight_dtype=jnp.float32)
    out32 = jax.block_until_ready(
        mlp_forward(x, p32, dims=dims, hidden_activation="relu",
                    output_activation="softmax", tb=16))
    assert out32.shape == (batch, architecture[-1])
    assert jnp.allclose(out32, ref, atol=1e-5, rtol=1e-5), "f32 mismatch vs reference"

    # Default path: bf16 MXU operands, f32 accumulation / f32 biases.
    pbf16, dims = prepare_params(params)           # weight_dtype=bfloat16 default
    outbf = jax.block_until_ready(
        mlp_forward(x, pbf16, dims=dims, hidden_activation="relu",
                    output_activation="softmax"))
    assert outbf.shape == (batch, architecture[-1])
    assert bool(jnp.all(jnp.isfinite(outbf)))
    assert jnp.allclose(outbf, ref, atol=1e-1, rtol=1e-1), "bf16 path diverged"

    print("KERNEL_OK")
</pallas_src>

<mosaic_0001>
module attributes {stable_mosaic.version = 11 : i64} {
  func.func @kernel(%arg0: i32, %arg1: memref<16x16xf32, #tpu.memory_space<vmem>>, %arg2: memref<16x128xf32, #tpu.memory_space<vmem>>, %arg3: memref<1x128xf32, #tpu.memory_space<vmem>>, %arg4: memref<128x128xf32, #tpu.memory_space<vmem>>, %arg5: memref<1x128xf32, #tpu.memory_space<vmem>>, %arg6: memref<128x10xf32, #tpu.memory_space<vmem>>, %arg7: memref<1x10xf32, #tpu.memory_space<vmem>>, %arg8: memref<16x10xf32, #tpu.memory_space<vmem>>) attributes {dimension_semantics = [#tpu.dimension_semantics<parallel>], iteration_bounds = array<i64: 3>, scalar_prefetch = 0 : i64, scratch_operands = 0 : i64, tpu.core_type = #tpu.core_type<tc>, window_params = [{transform_indices = @transform_0, window_bounds = array<i64: 16, 16>}, {pipeline_mode = #tpu.pipeline_mode<synchronous>, transform_indices = @transform_1, window_bounds = array<i64: 16, 128>}, {pipeline_mode = #tpu.pipeline_mode<synchronous>, transform_indices = @transform_2, window_bounds = array<i64: 1, 128>}, {pipeline_mode = #tpu.pipeline_mode<synchronous>, transform_indices = @transform_3, window_bounds = array<i64: 128, 128>}, {pipeline_mode = #tpu.pipeline_mode<synchronous>, transform_indices = @transform_4, window_bounds = array<i64: 1, 128>}, {pipeline_mode = #tpu.pipeline_mode<synchronous>, transform_indices = @transform_5, window_bounds = array<i64: 128, 10>}, {pipeline_mode = #tpu.pipeline_mode<synchronous>, transform_indices = @transform_6, window_bounds = array<i64: 1, 10>}, {transform_indices = @transform_7, window_bounds = array<i64: 16, 10>}]} {
    %c0 = arith.constant 0 : index
    %c0_0 = arith.constant 0 : index
    %0 = vector.load %arg1[%c0, %c0_0] : memref<16x16xf32, #tpu.memory_space<vmem>>, vector<16x16xf32>
    %c0_1 = arith.constant 0 : index
    %c0_2 = arith.constant 0 : index
    %1 = vector.load %arg2[%c0_1, %c0_2] : memref<16x128xf32, #tpu.memory_space<vmem>>, vector<16x128xf32>
    %cst = arith.constant dense<0.000000e+00> : vector<16x128xf32>
    %2 = tpu.matmul %0, %1, %cst {dimension_numbers = #tpu.dot_dimension_numbers<[1], [0], [0], [1], [0, 0, 1, 1], [], []>} : vector<16x16xf32>, vector<16x128xf32>, vector<16x128xf32> -> vector<16x128xf32>
    %c0_3 = arith.constant 0 : index
    %c0_4 = arith.constant 0 : index
    %3 = vector.load %arg3[%c0_3, %c0_4] : memref<1x128xf32, #tpu.memory_space<vmem>>, vector<1x128xf32>
    %4 = vector.broadcast %3 : vector<1x128xf32> to vector<16x128xf32>
    %5 = arith.addf %2, %4 : vector<16x128xf32>
    %cst_5 = arith.constant 0.000000e+00 : f32
    %6 = vector.broadcast %cst_5 : f32 to vector<16x128xf32>
    %7 = arith.maximumf %5, %6 : vector<16x128xf32>
    %c0_6 = arith.constant 0 : index
    %c0_7 = arith.constant 0 : index
    %8 = vector.load %arg4[%c0_6, %c0_7] : memref<128x128xf32, #tpu.memory_space<vmem>>, vector<128x128xf32>
    %cst_8 = arith.constant dense<0.000000e+00> : vector<16x128xf32>
    %9 = tpu.matmul %7, %8, %cst_8 {dimension_numbers = #tpu.dot_dimension_numbers<[1], [0], [0], [1], [0, 0, 1, 1], [], []>} : vector<16x128xf32>, vector<128x128xf32>, vector<16x128xf32> -> vector<16x128xf32>
    %c0_9 = arith.constant 0 : index
    %c0_10 = arith.constant 0 : index
    %10 = vector.load %arg5[%c0_9, %c0_10] : memref<1x128xf32, #tpu.memory_space<vmem>>, vector<1x128xf32>
    %11 = vector.broadcast %10 : vector<1x128xf32> to vector<16x128xf32>
    %12 = arith.addf %9, %11 : vector<16x128xf32>
    %cst_11 = arith.constant 0.000000e+00 : f32
    %13 = vector.broadcast %cst_11 : f32 to vector<16x128xf32>
    %14 = arith.maximumf %12, %13 : vector<16x128xf32>
    %c0_12 = arith.constant 0 : index
    %c0_13 = arith.constant 0 : index
    %15 = vector.load %arg6[%c0_12, %c0_13] : memref<128x10xf32, #tpu.memory_space<vmem>>, vector<128x10xf32>
    %cst_14 = arith.constant dense<0.000000e+00> : vector<16x10xf32>
    %16 = tpu.matmul %14, %15, %cst_14 {dimension_numbers = #tpu.dot_dimension_numbers<[1], [0], [0], [1], [0, 0, 1, 1], [], []>} : vector<16x128xf32>, vector<128x10xf32>, vector<16x10xf32> -> vector<16x10xf32>
    %c0_15 = arith.constant 0 : index
    %c0_16 = arith.constant 0 : index
    %17 = vector.load %arg7[%c0_15, %c0_16] : memref<1x10xf32, #tpu.memory_space<vmem>>, vector<1x10xf32>
    %18 = vector.broadcast %17 : vector<1x10xf32> to vector<16x10xf32>
    %19 = arith.addf %16, %18 : vector<16x10xf32>
    %cst_17 = arith.constant dense<0xFF800000> : vector<16xf32>
    %20 = vector.multi_reduction <maximumf>, %19, %cst_17 [1] : vector<16x10xf32> to vector<16xf32>
    %21 = vector.shape_cast %20 : vector<16xf32> to vector<16x1xf32>
    %22 = vector.broadcast %21 : vector<16x1xf32> to vector<16x10xf32>
    %23 = arith.subf %19, %22 : vector<16x10xf32>
    %24 = math.exp %23 : vector<16x10xf32>
    %cst_18 = arith.constant dense<0.000000e+00> : vector<16xf32>
    %25 = vector.multi_reduction <add>, %24, %cst_18 [1] : vector<16x10xf32> to vector<16xf32>
    %26 = vector.shape_cast %25 : vector<16xf32> to vector<16x1xf32>
    %27 = math.log %26 : vector<16x1xf32>
    %28 = vector.broadcast %27 : vector<16x1xf32> to vector<16x10xf32>
    %29 = arith.subf %23, %28 : vector<16x10xf32>
    %c0_19 = arith.constant 0 : index
    %c0_20 = arith.constant 0 : index
    %30 = vector.load %arg8[%c0_19, %c0_20] : memref<16x10xf32, #tpu.memory_space<vmem>>, vector<16x10xf32>
    tpu.vector_store %arg8[%c0_19, %c0_20], %29 {strides = array<i32>} : memref<16x10xf32, #tpu.memory_space<vmem>>, vector<16x10xf32>,
    return
  }
  func.func @transform_0(%arg0: i32) -> (i32, i32) {
    %c0_i32 = arith.constant 0 : i32
    %c0_i32_0 = arith.constant 0 : i32
    return %arg0, %c0_i32 : i32, i32
  }
  func.func @transform_1(%arg0: i32) -> (i32, i32) {
    %c0_i32 = arith.constant 0 : i32
    %c0_i32_0 = arith.constant 0 : i32
    %c0_i32_1 = arith.constant 0 : i32
    return %c0_i32, %c0_i32_0 : i32, i32
  }
  func.func @transform_2(%arg0: i32) -> (i32, i32) {
    %c0_i32 = arith.constant 0 : i32
    %c0_i32_0 = arith.constant 0 : i32
    %c0_i32_1 = arith.constant 0 : i32
    return %c0_i32, %c0_i32_0 : i32, i32
  }
  func.func @transform_3(%arg0: i32) -> (i32, i32) {
    %c0_i32 = arith.constant 0 : i32
    %c0_i32_0 = arith.constant 0 : i32
    %c0_i32_1 = arith.constant 0 : i32
    return %c0_i32, %c0_i32_0 : i32, i32
  }
  func.func @transform_4(%arg0: i32) -> (i32, i32) {
    %c0_i32 = arith.constant 0 : i32
    %c0_i32_0 = arith.constant 0 : i32
    %c0_i32_1 = arith.constant 0 : i32
    return %c0_i32, %c0_i32_0 : i32, i32
  }
  func.func @transform_5(%arg0: i32) -> (i32, i32) {
    %c0_i32 = arith.constant 0 : i32
    %c0_i32_0 = arith.constant 0 : i32
    %c0_i32_1 = arith.constant 0 : i32
    return %c0_i32, %c0_i32_0 : i32, i32
  }
  func.func @transform_6(%arg0: i32) -> (i32, i32) {
    %c0_i32 = arith.constant 0 : i32
    %c0_i32_0 = arith.constant 0 : i32
    %c0_i32_1 = arith.constant 0 : i32
    return %c0_i32, %c0_i32_0 : i32, i32
  }
  func.func @transform_7(%arg0: i32) -> (i32, i32) {
    %c0_i32 = arith.constant 0 : i32
    %c0_i32_0 = arith.constant 0 : i32
    return %arg0, %c0_i32 : i32, i32
  }
}

</mosaic_0001>

<llo_original>
// kernel: mlp_forward.1
$region0: #{mlp_forward.1}
  #allocation0 [shape = 'u32[]', space=smem, size = 0x4, offset = 0x4, fixed_abs, tag = 'smem constant byte address 0x4 - core index']
  #allocation1 [shape = 'u32[144,128]{1,0:T(1,128)}', space=vmem, size = 0x12000, scoped, tag = 'internal scratch']
  %s0 = inlined_call_operand.vmem [shape: f32[48,16], index: 0, kind: input, shape index: {}]
  %s1 = inlined_call_operand.vmem [shape: f32[16,128], index: 1, kind: input, shape index: {}]
  %s2 = inlined_call_operand.vmem [shape: f32[1,128], index: 2, kind: input, shape index: {}]
  %s3 = inlined_call_operand.vmem [shape: f32[128,128], index: 3, kind: input, shape index: {}]
  %s4 = inlined_call_operand.vmem [shape: f32[1,128], index: 4, kind: input, shape index: {}]
  %s5 = inlined_call_operand.vmem [shape: f32[128,10], index: 5, kind: input, shape index: {}]
  %s6 = inlined_call_operand.vmem [shape: f32[1,10], index: 6, kind: input, shape index: {}]
  %s7 = inlined_call_operand.vmem [shape: f32[48,10], index: 7, kind: output, shape index: {}]
  %s8 = sld [smem:[#allocation0]]
  $region61: #{mlp_forward.1} parent=0
    _
  %s10 = ssub.s32 1, %s8
  %s11 = scalar_select 0, %s10, %s8
  loop: start=0, step=1, limit=5
  $region2: #{mlp_forward.1} parent=0 // loop_pre_header
    _
  $region3: #{mlp_forward.1} parent=0 // loop_header
    %s13 = sphi 0, %s17
    %p14 = scmp.ge.s32.totalorder %s13, 5
    %s23 = sphi 0, %s25
    %s26 = sphi 0, %s23
    %s27 = sphi 0, %s26
    %s43 = sphi 0, %s27
    %s47 = sphi 0, %s47
    %s49 = sphi 0, %s47
    %s50 = sphi 0, %s49
    %s64 = sphi 0, %s50
    %s68 = sphi 0, %s68
    %s70 = sphi 0, %s68
    %s71 = sphi 0, %s70
    %s85 = sphi 0, %s71
    %s89 = sphi 0, %s89
    %s91 = sphi 0, %s89
    %s92 = sphi 0, %s91
    %s106 = sphi 0, %s92
    %s110 = sphi 0, %s110
    %s112 = sphi 0, %s110
    %s113 = sphi 0, %s112
    %s127 = sphi 0, %s113
    %s131 = sphi 0, %s131
    %s133 = sphi 0, %s131
    %s134 = sphi 0, %s133
    %s148 = sphi 0, %s134
    %s152 = sphi 0, %s152
    %s154 = sphi 0, %s152
    %s155 = sphi 0, %s154
    %s169 = sphi 0, %s155
    %s175 = sphi 0, %s177
    %s178 = sphi 0, %s175
    %s179 = sphi 0, %s178
    %s195 = sphi 0, %s179
  $region4: #{mlp_forward.1} parent=0 // loop_header_branch
    %16 = sbr.rel (%p14) target = $region8
  $region5: #{mlp_forward.1} parent=0 // loop_body
    %s18 = ssub.s32 %s13, 1
    %s19 = ssub.s32 %s13, 2
    %s20 = sadd.s32 %s13, 1
    %s21 = ssub.s32 %s13, %s20
    %p22 = scmp.eq.s32.totalorder %s21, 0
    %s24 = sadd.s32 %s23, 1
    %s25 = scalar_select %p22, %s23, %s24
    %p28 = pneg %p22
    %p29 = scmp.eq.s32.totalorder %s13, 2
    %p30 = por %p28, %p29
    %p31 = scmp.ne.s32.totalorder %s23, %s26
    %p32 = scmp.eq.s32.totalorder %s13, 0
    %p33 = por %p31, %p32
    %p34 = scmp.ne.s32.totalorder %s23, %s26
    %p35 = scmp.eq.s32.totalorder %s18, 2
    %p36 = por %p34, %p35
    %p37 = scmp.ne.s32.totalorder %s26, %s27
    %p38 = scmp.eq.s32.totalorder %s18, 0
    %p39 = por %p37, %p38
    %p40 = scmp.ne.s32.totalorder %s26, %s27
    %p41 = scmp.eq.s32.totalorder %s19, 2
    %p42 = por %p40, %p41
    %p44 = scmp.ne.s32.totalorder %s27, %s43
    %p45 = scmp.eq.s32.totalorder %s19, 0
    %p46 = por %p44, %p45
    %s48 = sadd.s32 %s47, 1
    %p51 = scmp.eq.s32.totalorder %s13, 2
    %p52 = scmp.ne.s32.totalorder %s47, %s49
    %p53 = scmp.eq.s32.totalorder %s13, 0
    %p54 = por %p52, %p53
    %p55 = scmp.ne.s32.totalorder %s47, %s49
    %p56 = scmp.eq.s32.totalorder %s18, 2
    %p57 = por %p55, %p56
    %p58 = scmp.ne.s32.totalorder %s49, %s50
    %p59 = scmp.eq.s32.totalorder %s18, 0
    %p60 = por %p58, %p59
    %p61 = scmp.ne.s32.totalorder %s49, %s50
    %p62 = scmp.eq.s32.totalorder %s19, 2
    %p63 = por %p61, %p62
    %p65 = scmp.ne.s32.totalorder %s50, %s64
    %p66 = scmp.eq.s32.totalorder %s19, 0
    %p67 = por %p65, %p66
    %s69 = sadd.s32 %s68, 1
    %p72 = scmp.eq.s32.totalorder %s13, 2
    %p73 = scmp.ne.s32.totalorder %s68, %s70
    %p74 = scmp.eq.s32.totalorder %s13, 0
    %p75 = por %p73, %p74
    %p76 = scmp.ne.s32.totalorder %s68, %s70
    %p77 = scmp.eq.s32.totalorder %s18, 2
    %p78 = por %p76, %p77
    %p79 = scmp.ne.s32.totalorder %s70, %s71
    %p80 = scmp.eq.s32.totalorder %s18, 0
    %p81 = por %p79, %p80
    %p82 = scmp.ne.s32.totalorder %s70, %s71
    %p83 = scmp.eq.s32.totalorder %s19, 2
    %p84 = por %p82, %p83
    %p86 = scmp.ne.s32.totalorder %s71, %s85
    %p87 = scmp.eq.s32.totalorder %s19, 0
    %p88 = por %p86, %p87
    %s90 = sadd.s32 %s89, 1
    %p93 = scmp.eq.s32.totalorder %s13, 2
    %p94 = scmp.ne.s32.totalorder %s89, %s91
    %p95 = scmp.eq.s32.totalorder %s13, 0
    %p96 = por %p94, %p95
    %p97 = scmp.ne.s32.totalorder %s89, %s91
    %p98 = scmp.eq.s32.totalorder %s18, 2
    %p99 = por %p97, %p98
    %p100 = scmp.ne.s32.totalorder %s91, %s92
    %p101 = scmp.eq.s32.totalorder %s18, 0
    %p102 = por %p100, %p101
    %p103 = scmp.ne.s32.totalorder %s91, %s92
    %p104 = scmp.eq.s32.totalorder %s19, 2
    %p105 = por %p103, %p104
    %p107 = scmp.ne.s32.totalorder %s92, %s106
    %p108 = scmp.eq.s32.totalorder %s19, 0
    %p109 = por %p107, %p108
    %s111 = sadd.s32 %s110, 1
    %p114 = scmp.eq.s32.totalorder %s13, 2
    %p115 = scmp.ne.s32.totalorder %s110, %s112
    %p116 = scmp.eq.s32.totalorder %s13, 0
    %p117 = por %p115, %p116
    %p118 = scmp.ne.s32.totalorder %s110, %s112
    %p119 = scmp.eq.s32.totalorder %s18, 2
    %p120 = por %p118, %p119
    %p121 = scmp.ne.s32.totalorder %s112, %s113
    %p122 = scmp.eq.s32.totalorder %s18, 0
    %p123 = por %p121, %p122
    %p124 = scmp.ne.s32.totalorder %s112, %s113
    %p125 = scmp.eq.s32.totalorder %s19, 2
    %p126 = por %p124, %p125
    %p128 = scmp.ne.s32.totalorder %s113, %s127
    %p129 = scmp.eq.s32.totalorder %s19, 0
    %p130 = por %p128, %p129
    %s132 = sadd.s32 %s131, 1
    %p135 = scmp.eq.s32.totalorder %s13, 2
    %p136 = scmp.ne.s32.totalorder %s131, %s133
    %p137 = scmp.eq.s32.totalorder %s13, 0
    %p138 = por %p136, %p137
    %p139 = scmp.ne.s32.totalorder %s131, %s133
    %p140 = scmp.eq.s32.totalorder %s18, 2
    %p141 = por %p139, %p140
    %p142 = scmp.ne.s32.totalorder %s133, %s134
    %p143 = scmp.eq.s32.totalorder %s18, 0
    %p144 = por %p142, %p143
    %p145 = scmp.ne.s32.totalorder %s133, %s134
    %p146 = scmp.eq.s32.totalorder %s19, 2
    %p147 = por %p145, %p146
    %p149 = scmp.ne.s32.totalorder %s134, %s148
    %p150 = scmp.eq.s32.totalorder %s19, 0
    %p151 = por %p149, %p150
    %s153 = sadd.s32 %s152, 1
    %p156 = scmp.eq.s32.totalorder %s13, 2
    %p157 = scmp.ne.s32.totalorder %s152, %s154
    %p158 = scmp.eq.s32.totalorder %s13, 0
    %p159 = por %p157, %p158
    %p160 = scmp.ne.s32.totalorder %s152, %s154
    %p161 = scmp.eq.s32.totalorder %s18, 2
    %p162 = por %p160, %p161
    %p163 = scmp.ne.s32.totalorder %s154, %s155
    %p164 = scmp.eq.s32.totalorder %s18, 0
    %p165 = por %p163, %p164
    %p166 = scmp.ne.s32.totalorder %s154, %s155
    %p167 = scmp.eq.s32.totalorder %s19, 2
    %p168 = por %p166, %p167
    %p170 = scmp.ne.s32.totalorder %s155, %s169
    %p171 = scmp.eq.s32.totalorder %s19, 0
    %p172 = por %p170, %p171
    %s173 = ssub.s32 %s13, %s20
    %p174 = scmp.eq.s32.totalorder %s173, 0
    %s176 = sadd.s32 %s175, 1
    %s177 = scalar_select %p174, %s175, %s176
    %p180 = pneg %p174
    %p181 = scmp.eq.s32.totalorder %s13, 2
    %p182 = por %p180, %p181
    %p183 = scmp.ne.s32.totalorder %s175, %s178
    %p184 = scmp.eq.s32.totalorder %s13, 0
    %p185 = por %p183, %p184
    %p186 = scmp.ne.s32.totalorder %s175, %s178
    %p187 = scmp.eq.s32.totalorder %s18, 2
    %p188 = por %p186, %p187
    %p189 = scmp.ne.s32.totalorder %s178, %s179
    %p190 = scmp.eq.s32.totalorder %s18, 0
    %p191 = por %p189, %p190
    %p192 = scmp.ne.s32.totalorder %s178, %s179
    %p193 = scmp.eq.s32.totalorder %s19, 2
    %p194 = por %p192, %p193
    %p196 = scmp.ne.s32.totalorder %s179, %s195
    %p197 = scmp.eq.s32.totalorder %s19, 0
    %p198 = por %p196, %p197
    %p199 = scmp.le.s32.totalorder 1, %s13
    %p200 = scmp.lt.s32.totalorder %s13, 4
    %p201 = pnand %p199, %p200
    %p202 = pneg %p201
    // Predicated region
    $region9: #{mlp_forward.1} parent=5 // pred_check
      _
    $region10: #{mlp_forward.1} parent=5 // pred_check_branch
      %204 = sbr.rel (%p201) target = $region12
    $region11: #{mlp_forward.1} parent=5 // pred_region
      %s205 = ssub.s32 %s13, 1
      // Predicated region
      $region13: #{mlp_forward.1} parent=11 // pred_check
        %p206 = pneg %p60
      $region14: #{mlp_forward.1} parent=11 // pred_check_branch
        %208 = sbr.rel (%p206) target = $region16
      $region15: #{mlp_forward.1} parent=11 // pred_region
        _
      $region16: #{mlp_forward.1} parent=11 // pred_fallthru
        _
      // Predicated region
      $region17: #{mlp_forward.1} parent=11 // pred_check
        %p209 = pneg %p81
      $region18: #{mlp_forward.1} parent=11 // pred_check_branch
        %211 = sbr.rel (%p209) target = $region20
      $region19: #{mlp_forward.1} parent=11 // pred_region
        _
      $region20: #{mlp_forward.1} parent=11 // pred_fallthru
        _
      // Predicated region
      $region21: #{mlp_forward.1} parent=11 // pred_check
        %p212 = pneg %p102
      $region22: #{mlp_forward.1} parent=11 // pred_check_branch
        %214 = sbr.rel (%p212) target = $region24
      $region23: #{mlp_forward.1} parent=11 // pred_region
        _
      $region24: #{mlp_forward.1} parent=11 // pred_fallthru
        _
      // Predicated region
      $region25: #{mlp_forward.1} parent=11 // pred_check
        %p215 = pneg %p123
      $region26: #{mlp_forward.1} parent=11 // pred_check_branch
        %217 = sbr.rel (%p215) target = $region28
      $region27: #{mlp_forward.1} parent=11 // pred_region
        _
      $region28: #{mlp_forward.1} parent=11 // pred_fallthru
        _
      // Predicated region
      $region29: #{mlp_forward.1} parent=11 // pred_check
        %p218 = pneg %p144
      $region30: #{mlp_forward.1} parent=11 // pred_check_branch
        %220 = sbr.rel (%p218) target = $region32
      $region31: #{mlp_forward.1} parent=11 // pred_region
        _
      $region32: #{mlp_forward.1} parent=11 // pred_fallthru
        _
      // Predicated region
      $region33: #{mlp_forward.1} parent=11 // pred_check
        %p221 = pneg %p165
      $region34: #{mlp_forward.1} parent=11 // pred_check_branch
        %223 = sbr.rel (%p221) target = $region36
      $region35: #{mlp_forward.1} parent=11 // pred_region
        _
      $region36: #{mlp_forward.1} parent=11 // pred_fallthru
        _
    $region12: #{mlp_forward.1} parent=5 // pred_fallthru
      _
    %p224 = scmp.lt.s32.totalorder %s13, 3
    // Predicated region
    $region37: #{mlp_forward.1} parent=5 // pred_check
      %p225 = pneg %p224
    $region38: #{mlp_forward.1} parent=5 // pred_check_branch
      %227 = sbr.rel (%p225) target = $region40
    $region39: #{mlp_forward.1} parent=5 // pred_region
      // Predicated region
      $region41: #{mlp_forward.1} parent=39 // pred_check
        %p228 = pneg %p33
      $region42: #{mlp_forward.1} parent=39 // pred_check_branch
        %230 = sbr.rel (%p228) target = $region44
      $region43: #{mlp_forward.1} parent=39 // pred_region
        %s231 = smul.u32 2, %s13
        %p232 = scmp.lt.s32.totalorder %s231, 5
        %s233 = scalar_select %p232, %s231, 5
        %s234 = smul.addr %s233, 8
        %s235 = scalar_lea.vmem %s0, %s234
        %s236 = smul.u32 2, %s13
      $region44: #{mlp_forward.1} parent=39 // pred_fallthru
        _
    $region40: #{mlp_forward.1} parent=5 // pred_fallthru
      _
    %p237 = scmp.le.s32.totalorder 1, %s13
    %p238 = scmp.lt.s32.totalorder %s13, 4
    %p239 = pnand %p237, %p238
    %p240 = pneg %p239
    // Predicated region
    $region45: #{mlp_forward.1} parent=5 // pred_check
      _
    $region46: #{mlp_forward.1} parent=5 // pred_check_branch
      %242 = sbr.rel (%p239) target = $region48
    $region47: #{mlp_forward.1} parent=5 // pred_region
      %s243 = ssub.s32 %s13, 1
      %s244 = smul.u32 2, %s18
      %p245 = scmp.lt.s32.totalorder %s244, 5
      %s246 = scalar_select %p245, %s244, 5
      %s247 = smul.addr %s246, 8
      %s248 = scalar_lea.vmem %s0, %s247
      %p249 = pneg %p39
      %p250 = pneg %p36
      %p251 = pneg %p60
      %p252 = pneg %p57
      %p253 = pneg %p81
      %p254 = pneg %p78
      %p255 = pneg %p102
      %p256 = pneg %p99
      %p257 = pneg %p123
      %p258 = pneg %p120
      %p259 = pneg %p144
      %p260 = pneg %p141
      %p261 = pneg %p165
      %p262 = pneg %p162
      %p263 = pneg %p191
      %p264 = pneg %p188
      %s265 = smul.u32 2, %s18
      %p266 = scmp.lt.s32.totalorder %s265, 5
      %s267 = scalar_select %p266, %s265, 5
      %s268 = smul.addr %s267, 8
      %s269 = scalar_lea.vmem %s7, %s268
      %s270 = smul.u32 2, %s18
      %p271 = scmp.lt.s32.totalorder %s270, 5
      %s272 = scalar_select %p271, %s270, 5
      %s273 = smul.addr %s272, 8
      %s274 = scalar_lea.vmem %s0, %s273
      %s275 = smul.u32 2, %s18
      %s276 = smul.u32 2, %s18
      %p277 = scmp.lt.s32.totalorder %s276, 5
      %s278 = scalar_select %p277, %s276, 5
      %s279 = smul.addr %s278, 8
      %s280 = scalar_lea.vmem %s7, %s279
      %s281 = smul.u32 2, %s18
      %v282 = vld [vmem:[%s274] sm:$0xff]
      %v283 = vld [vmem:[%s274 + $0x8] sm:$0xff]
      %v284 = vld [vmem:[%s1] sm:$0xff]
      %v285 = vld [vmem:[%s1 + $0x8] sm:$0xff]
      %v286 = vld [vmem:[%s2] sm:$0x1]
      %v288 = vlaneseq
      %v289 = vshrl.u32 %v288, 7
      %v290 = vsub.s32 0, %v289
      %v291 = vrot.slane %v286, %v290
      %vm293 = vcmask 130048
      %v295 = vsel %vm293, %v282, 0
      %v298 = vsel %vm293, %v283, 0
      %300 = vmatprep.subr.mxu0 0.0
      %301 = vmatpush1.msra.mxu0 0.0
      %302 = vmatprep.subr.mxu0 0.0
      %303 = vmatpush1.msra.mxu0 0.0
      %304 = vmatprep.subr.mxu0 0.0
      %305 = vmatpush1.msra.mxu0 0.0
      %306 = vmatprep.subr.mxu0 0.0
      %307 = vmatpush1.msra.mxu0 0.0
      %308 = vmatprep.subr.mxu0 0.0
      %309 = vmatpush1.msra.mxu0 0.0
      %310 = vmatprep.subr.mxu0 0.0
      %311 = vmatpush1.msra.mxu0 0.0
      %312 = vmatprep.subr.mxu0 0.0
      %313 = vmatpush1.msra.mxu0 0.0
      %314 = vmatprep.subr.mxu0 0.0
      %315 = vmatpush1.msra.mxu0 0.0
      %316 = vmatprep.subr.mxu0 0.0
      %317 = vmatpush1.msra.mxu0 0.0
      %318 = vmatprep.subr.mxu0 0.0
      %319 = vmatpush1.msra.mxu0 0.0
      %320 = vmatprep.subr.mxu0 0.0
      %321 = vmatpush1.msra.mxu0 0.0
      %322 = vmatprep.subr.mxu0 0.0
      %323 = vmatpush1.msra.mxu0 0.0
      %324 = vmatprep.subr.mxu0 0.0
      %325 = vmatpush1.msra.mxu0 0.0
      %326 = vmatprep.subr.mxu0 0.0
      %327 = vmatpush1.msra.mxu0 0.0
      %328 = vmatprep.subr.mxu0 0.0
      %329 = vmatpush1.msra.mxu0 %v285
      %330 = vmatprep.subr.mxu0 0.0
      %331 = vmatpush1.msra.mxu0 %v284
      %332 = vmatprep.subr.mxu0 0.0
      %333 = vmatpush2.msra.mxu0 0.0
      %334 = vmatprep.subr.mxu0 0.0
      %335 = vmatpush2.msra.mxu0 0.0
      %336 = vmatprep.subr.mxu0 0.0
      %337 = vmatpush2.msra.mxu0 0.0
      %338 = vmatprep.subr.mxu0 0.0
      %339 = vmatpush2.msra.mxu0 0.0
      %340 = vmatprep.subr.mxu0 0.0
      %341 = vmatpush2.msra.mxu0 0.0
      %342 = vmatprep.subr.mxu0 0.0
      %343 = vmatpush2.msra.mxu0 0.0
      %344 = vmatprep.subr.mxu0 0.0
      %345 = vmatpush2.msra.mxu0 0.0
      %346 = vmatprep.subr.mxu0 0.0
      %347 = vmatpush2.msra.mxu0 0.0
      %348 = vmatprep.subr.mxu0 0.0
      %349 = vmatpush2.msra.mxu0 0.0
      %350 = vmatprep.subr.mxu0 0.0
      %351 = vmatpush2.msra.mxu0 0.0
      %352 = vmatprep.subr.mxu0 0.0
      %353 = vmatpush2.msra.mxu0 0.0
      %354 = vmatprep.subr.mxu0 0.0
      %355 = vmatpush2.msra.mxu0 0.0
      %356 = vmatprep.subr.mxu0 0.0
      %357 = vmatpush2.msra.mxu0 0.0
      %358 = vmatprep.subr.mxu0 0.0
      %359 = vmatpush2.msra.mxu0 0.0
      %360 = vmatprep.subr.mxu0 0.0
      %361 = vmatpush2.msra.mxu0 0.0
      %362 = vmatprep.subr.mxu0 0.0
      %363 = vmatpush2.msra.mxu0 0.0
      %364 = vmatprep.mubr.f32.mxu0 0.0
      %365 = vmatmul.mubr.f32.gmra.mxu0 %v295
      %v366 = vpop.f32.mrf.mxu0
      %v367 = vadd.f32 %v291, %v366
      %v368 = vpop.f32.mrf.mxu0
      %369 = vmatprep.mubr.f32.mxu0 0.0
      %370 = vmatmul.mubr.f32.gmra.mxu0 %v298
      %v371 = vpop.f32.mrf.mxu0
      %v372 = vadd.f32 %v291, %v371
      %v373 = vpop.f32.mrf.mxu0
      %374 = vdwg.mxu0
      %v375 = vmax.f32 %v367, 0.0
      %v376 = vmax.f32 %v372, 0.0
      %v377 = vld [vmem:[%s3] sm:$0xff]
      %v378 = vld [vmem:[%s3 + $0x8] sm:$0xff]
      %v379 = vld [vmem:[%s3 + $0x10] sm:$0xff]
      %v380 = vld [vmem:[%s3 + $0x18] sm:$0xff]
      %v381 = vld [vmem:[%s3 + $0x20] sm:$0xff]
      %v382 = vld [vmem:[%s3 + $0x28] sm:$0xff]
      %v383 = vld [vmem:[%s3 + $0x30] sm:$0xff]
      %v384 = vld [vmem:[%s3 + $0x38] sm:$0xff]
      %v385 = vld [vmem:[%s3 + $0x40] sm:$0xff]
      %v386 = vld [vmem:[%s3 + $0x48] sm:$0xff]
      %v387 = vld [vmem:[%s3 + $0x50] sm:$0xff]
      %v388 = vld [vmem:[%s3 + $0x58] sm:$0xff]
      %v389 = vld [vmem:[%s3 + $0x60] sm:$0xff]
      %v390 = vld [vmem:[%s3 + $0x68] sm:$0xff]
      %v391 = vld [vmem:[%s3 + $0x70] sm:$0xff]
      %v392 = vld [vmem:[%s3 + $0x78] sm:$0xff]
      %v393 = vld [vmem:[%s4] sm:$0x1]
      %v395 = vlaneseq
      %v396 = vshrl.u32 %v395, 7
      %v397 = vsub.s32 0, %v396
      %v398 = vrot.slane %v393, %v397
      %400 = vmatprep.subr.mxu0 0.0
      %401 = vmatpush1.msra.mxu0 %v392
      %402 = vmatprep.subr.mxu0 0.0
      %403 = vmatpush1.msra.mxu0 %v391
      %404 = vmatprep.subr.mxu0 0.0
      %405 = vmatpush1.msra.mxu0 %v390
      %406 = vmatprep.subr.mxu0 0.0
      %407 = vmatpush1.msra.mxu0 %v389
      %408 = vmatprep.subr.mxu0 0.0
      %409 = vmatpush1.msra.mxu0 %v388
      %410 = vmatprep.subr.mxu0 0.0
      %411 = vmatpush1.msra.mxu0 %v387
      %412 = vmatprep.subr.mxu0 0.0
      %413 = vmatpush1.msra.mxu0 %v386
      %414 = vmatprep.subr.mxu0 0.0
      %415 = vmatpush1.msra.mxu0 %v385
      %416 = vmatprep.subr.mxu0 0.0
      %417 = vmatpush1.msra.mxu0 %v384
      %418 = vmatprep.subr.mxu0 0.0
      %419 = vmatpush1.msra.mxu0 %v383
      %420 = vmatprep.subr.mxu0 0.0
      %421 = vmatpush1.msra.mxu0 %v382
      %422 = vmatprep.subr.mxu0 0.0
      %423 = vmatpush1.msra.mxu0 %v381
      %424 = vmatprep.subr.mxu0 0.0
      %425 = vmatpush1.msra.mxu0 %v380
      %426 = vmatprep.subr.mxu0 0.0
      %427 = vmatpush1.msra.mxu0 %v379
      %428 = vmatprep.subr.mxu0 0.0
      %429 = vmatpush1.msra.mxu0 %v378
      %430 = vmatprep.subr.mxu0 0.0
      %431 = vmatpush1.msra.mxu0 %v377
      %432 = vmatprep.subr.mxu0 0.0
      %433 = vmatpush2.msra.mxu0 0.0
      %434 = vmatprep.subr.mxu0 0.0
      %435 = vmatpush2.msra.mxu0 0.0
      %436 = vmatprep.subr.mxu0 0.0
      %437 = vmatpush2.msra.mxu0 0.0
      %438 = vmatprep.subr.mxu0 0.0
      %439 = vmatpush2.msra.mxu0 0.0
      %440 = vmatprep.subr.mxu0 0.0
      %441 = vmatpush2.msra.mxu0 0.0
      %442 = vmatprep.subr.mxu0 0.0
      %443 = vmatpush2.msra.mxu0 0.0
      %444 = vmatprep.subr.mxu0 0.0
      %445 = vmatpush2.msra.mxu0 0.0
      %446 = vmatprep.subr.mxu0 0.0
      %447 = vmatpush2.msra.mxu0 0.0
      %448 = vmatprep.subr.mxu0 0.0
      %449 = vmatpush2.msra.mxu0 0.0
      %450 = vmatprep.subr.mxu0 0.0
      %451 = vmatpush2.msra.mxu0 0.0
      %452 = vmatprep.subr.mxu0 0.0
      %453 = vmatpush2.msra.mxu0 0.0
      %454 = vmatprep.subr.mxu0 0.0
      %455 = vmatpush2.msra.mxu0 0.0
      %456 = vmatprep.subr.mxu0 0.0
      %457 = vmatpush2.msra.mxu0 0.0
      %458 = vmatprep.subr.mxu0 0.0
      %459 = vmatpush2.msra.mxu0 0.0
      %460 = vmatprep.subr.mxu0 0.0
      %461 = vmatpush2.msra.mxu0 0.0
      %462 = vmatprep.subr.mxu0 0.0
      %463 = vmatpush2.msra.mxu0 0.0
      %464 = vmatprep.mubr.f32.mxu0 0.0
      %465 = vmatmul.mubr.f32.gmra.mxu0 %v375
      %v466 = vpop.f32.mrf.mxu0
      %v467 = vadd.f32 %v398, %v466
      %v468 = vpop.f32.mrf.mxu0
      %469 = vmatprep.mubr.f32.mxu0 0.0
      %470 = vmatmul.mubr.f32.gmra.mxu0 %v376
      %v471 = vpop.f32.mrf.mxu0
      %v472 = vadd.f32 %v398, %v471
      %v473 = vpop.f32.mrf.mxu0
      %474 = vdwg.mxu0
      %v475 = vmax.f32 %v467, 0.0
      %v476 = vmax.f32 %v472, 0.0
      %v477 = vld [vmem:[%s5] sm:$0xff]
      %v478 = vld [vmem:[%s5 + $0x8] sm:$0xff]
      %v479 = vld [vmem:[%s5 + $0x10] sm:$0xff]
      %v480 = vld [vmem:[%s5 + $0x18] sm:$0xff]
      %v481 = vld [vmem:[%s5 + $0x20] sm:$0xff]
      %v482 = vld [vmem:[%s5 + $0x28] sm:$0xff]
      %v483 = vld [vmem:[%s5 + $0x30] sm:$0xff]
      %v484 = vld [vmem:[%s5 + $0x38] sm:$0xff]
      %v485 = vld [vmem:[%s5 + $0x40] sm:$0xff]
      %v486 = vld [vmem:[%s5 + $0x48] sm:$0xff]
      %v487 = vld [vmem:[%s5 + $0x50] sm:$0xff]
      %v488 = vld [vmem:[%s5 + $0x58] sm:$0xff]
      %v489 = vld [vmem:[%s5 + $0x60] sm:$0xff]
      %v490 = vld [vmem:[%s5 + $0x68] sm:$0xff]
      %v491 = vld [vmem:[%s5 + $0x70] sm:$0xff]
      %v492 = vld [vmem:[%s5 + $0x78] sm:$0xff]
      %v493 = vld [vmem:[%s6] sm:$0x1]
      %v495 = vlaneseq
      %v496 = vshrl.u32 %v495, 7
      %v497 = vsub.s32 0, %v496
      %v498 = vrot.slane %v493, %v497
      %500 = vmatprep.subr.mxu0 0.0
      %501 = vmatpush1.msra.mxu0 %v492
      %502 = vmatprep.subr.mxu0 0.0
      %503 = vmatpush1.msra.mxu0 %v491
      %504 = vmatprep.subr.mxu0 0.0
      %505 = vmatpush1.msra.mxu0 %v490
      %506 = vmatprep.subr.mxu0 0.0
      %507 = vmatpush1.msra.mxu0 %v489
      %508 = vmatprep.subr.mxu0 0.0
      %509 = vmatpush1.msra.mxu0 %v488
      %510 = vmatprep.subr.mxu0 0.0
      %511 = vmatpush1.msra.mxu0 %v487
      %512 = vmatprep.subr.mxu0 0.0
      %513 = vmatpush1.msra.mxu0 %v486
      %514 = vmatprep.subr.mxu0 0.0
      %515 = vmatpush1.msra.mxu0 %v485
      %516 = vmatprep.subr.mxu0 0.0
      %517 = vmatpush1.msra.mxu0 %v484
      %518 = vmatprep.subr.mxu0 0.0
      %519 = vmatpush1.msra.mxu0 %v483
      %520 = vmatprep.subr.mxu0 0.0
      %521 = vmatpush1.msra.mxu0 %v482
      %522 = vmatprep.subr.mxu0 0.0
      %523 = vmatpush1.msra.mxu0 %v481
      %524 = vmatprep.subr.mxu0 0.0
      %525 = vmatpush1.msra.mxu0 %v480
      %526 = vmatprep.subr.mxu0 0.0
      %527 = vmatpush1.msra.mxu0 %v479
      %528 = vmatprep.subr.mxu0 0.0
      %529 = vmatpush1.msra.mxu0 %v478
      %530 = vmatprep.subr.mxu0 0.0
      %531 = vmatpush1.msra.mxu0 %v477
      %532 = vmatprep.subr.mxu0 0.0
      %533 = vmatpush2.msra.mxu0 0.0
      %534 = vmatprep.subr.mxu0 0.0
      %535 = vmatpush2.msra.mxu0 0.0
      %536 = vmatprep.subr.mxu0 0.0
      %537 = vmatpush2.msra.mxu0 0.0
      %538 = vmatprep.subr.mxu0 0.0
      %539 = vmatpush2.msra.mxu0 0.0
      %540 = vmatprep.subr.mxu0 0.0
      %541 = vmatpush2.msra.mxu0 0.0
      %542 = vmatprep.subr.mxu0 0.0
      %543 = vmatpush2.msra.mxu0 0.0
      %544 = vmatprep.subr.mxu0 0.0
      %545 = vmatpush2.msra.mxu0 0.0
      %546 = vmatprep.subr.mxu0 0.0
      %547 = vmatpush2.msra.mxu0 0.0
      %548 = vmatprep.subr.mxu0 0.0
      %549 = vmatpush2.msra.mxu0 0.0
      %550 = vmatprep.subr.mxu0 0.0
      %551 = vmatpush2.msra.mxu0 0.0
      %552 = vmatprep.subr.mxu0 0.0
      %553 = vmatpush2.msra.mxu0 0.0
      %554 = vmatprep.subr.mxu0 0.0
      %555 = vmatpush2.msra.mxu0 0.0
      %556 = vmatprep.subr.mxu0 0.0
      %557 = vmatpush2.msra.mxu0 0.0
      %558 = vmatprep.subr.mxu0 0.0
      %559 = vmatpush2.msra.mxu0 0.0
      %560 = vmatprep.subr.mxu0 0.0
      %561 = vmatpush2.msra.mxu0 0.0
      %562 = vmatprep.subr.mxu0 0.0
      %563 = vmatpush2.msra.mxu0 0.0
      %564 = vmatprep.mubr.f32.mxu0 0.0
      %565 = vmatmul.mubr.f32.gmra.mxu0 %v475
      %v566 = vpop.f32.mrf.mxu0
      %v567 = vadd.f32 %v498, %v566
      %v568 = vpop.f32.mrf.mxu0
      %569 = vmatprep.mubr.f32.mxu0 0.0
      %570 = vmatmul.mubr.f32.gmra.mxu0 %v476
      %v571 = vpop.f32.mrf.mxu0
      %v572 = vadd.f32 %v498, %v571
      %v573 = vpop.f32.mrf.mxu0
      %574 = vdwg.mxu0
      %vm575 = vcmask 80896
      %v576 = vsel %vm575, %v567, -inf
      %577 = vmax.xlane.f32.xlu0 %v576
      %v578 = vpop.xlane.xlu0 %577
      %v579 = vsel %vm575, %v572, -inf
      %580 = vmax.xlane.f32.xlu0 %v579
      %v581 = vpop.xlane.xlu0 %580
      %v582 = vsub.f32 %v567, %v578
      %v583 = vsub.f32 %v572, %v581
      %v584 = vmul.f32 %v582, 1.442695
      %v585 = vpow.pop %v584
      %v586 = vmul.f32 %v583, 1.442695
      %v587 = vpow.pop %v586
      %v588 = vsel %vm575, %v585, 0.0
      %589 = vadd.xlane.f32.xlu0 %v588
      %v590 = vpop.xlane.xlu0 %589
      %v591 = vsel %vm575, %v587, 0.0
      %592 = vadd.xlane.f32.xlu0 %v591
      %v593 = vpop.xlane.xlu0 %592
      %v594 = vlog2.pop %v590
      %v595 = vmul.f32 %v594, 0.6931472
      %v596 = vlog2.pop %v593
      %v597 = vmul.f32 %v596, 0.6931472
      %v598 = vsub.f32 %v582, %v595
      %v599 = vsub.f32 %v583, %v597
      %600 = vst.msk [vmem:[%s280] sm:$0xff] %vm575, %v598
      %601 = vst.msk [vmem:[%s280 + $0x8] sm:$0xff] %vm575, %v599
      %s602 = smul.u32 2, %s18
      %p603 = scmp.lt.s32.totalorder %s602, 5
      %s604 = scalar_select %p603, %s602, 5
      %s605 = smul.addr %s604, 8
      %s606 = scalar_lea.vmem %s7, %s605
      // Predicated region
      $region49: #{mlp_forward.1} parent=47 // pred_check
        %p607 = pneg %p188
      $region50: #{mlp_forward.1} parent=47 // pred_check_branch
        %609 = sbr.rel (%p607) target = $region52
      $region51: #{mlp_forward.1} parent=47 // pred_region
        %s610 = smul.u32 2, %s18
      $region52: #{mlp_forward.1} parent=47 // pred_fallthru
        _
    $region48: #{mlp_forward.1} parent=5 // pred_fallthru
      _
    %p611 = scmp.le.s32.totalorder 2, %s13
    // Predicated region
    $region53: #{mlp_forward.1} parent=5 // pred_check
      %p612 = pneg %p611
    $region54: #{mlp_forward.1} parent=5 // pred_check_branch
      %614 = sbr.rel (%p612) target = $region56
    $region55: #{mlp_forward.1} parent=5 // pred_region
      %s615 = ssub.s32 %s13, 2
      // Predicated region
      $region57: #{mlp_forward.1} parent=55 // pred_check
        %p616 = pneg %p194
      $region58: #{mlp_forward.1} parent=55 // pred_check_branch
        %618 = sbr.rel (%p616) target = $region60
      $region59: #{mlp_forward.1} parent=55 // pred_region
        %s619 = smul.u32 2, %s19
        %p620 = scmp.lt.s32.totalorder %s619, 5
        %s621 = scalar_select %p620, %s619, 5
        %s622 = smul.addr %s621, 8
        %s623 = scalar_lea.vmem %s7, %s622
      $region60: #{mlp_forward.1} parent=55 // pred_fallthru
        _
    $region56: #{mlp_forward.1} parent=5 // pred_fallthru
      _
  $region6: #{mlp_forward.1} parent=0 // loop_footer
    %s17 = sadd.s32 1, %s13
  $region7: #{mlp_forward.1} parent=0 // loop_footer_branch
    %12 = sbr.rel target = $region3
  $region8: #{mlp_forward.1} parent=0 // loop_exit
    _

</llo_original>
